<compile_context>
chip_gen: v6e
topology: v6e:2x2x1
jax: 0.10.0
libtpu: 0.0.40
codegen_flags: <defaults>
</compile_context>

<pallas_src>
import functools

import jax
import jax.numpy as jnp
from jax.experimental import pallas as pl
from jax.experimental.pallas import tpu as pltpu


def _round_up(x, m):
    return (x + m - 1) // m * m


def _fused_first_conv_kernel(w_ref, b_ref, p_ref, o_ref):
    # w_ref: (C_out, K)   bf16 folded weights (W/255), K = C_in*kh*kw, resident across grid
    # b_ref: (C_out, 1)   f32 folded bias (b - 0.5*sum_K W), resident across grid
    # p_ref: (K, TM)      bf16 raw-pixel im2col columns for this tile
    # o_ref: (C_out, TM)  bf16 output tile, pixel axis on lanes (TM multiple of 128)
    acc = jnp.dot(w_ref[...], p_ref[...].astype(jnp.bfloat16),
                  preferred_element_type=jnp.float32)          # bf16 MXU, f32 accumulate
    acc = acc + b_ref[...]                                     # bias (broadcast over lanes)
    o_ref[...] = jnp.maximum(acc, 0.0).astype(o_ref.dtype)     # ReLU (Identity norm)


def _im2col_T(x, k, s):
    """(B, C, H, W) -> patches^T of shape (C*k*k, B*Ho*Wo).

    Element order along K matches weight.reshape(C_out, C_in*k*k)."""
    B, C, H, W = x.shape
    Ho = (H - k) // s + 1
    Wo = (W - k) // s + 1
    cols = []
    for di in range(k):
        for dj in range(k):
            cols.append(x[:, :, di:di + s * (Ho - 1) + 1:s, dj:dj + s * (Wo - 1) + 1:s])
    p = jnp.stack(cols, axis=0)             # (k*k, B, C, Ho, Wo)
    p = p.transpose(2, 0, 1, 3, 4)          # (C, k*k, B, Ho, Wo)
    p = p.reshape(C * k * k, B * Ho * Wo)   # (K, M)
    return p, Ho, Wo


@functools.partial(jax.jit, static_argnames=("stride", "tm"))
def encoder_first_layer_cm(obs, weight, bias, *, stride=2, tm=4096):
    """Fused (obs/255 - 0.5) -> Conv2d(C_in, C_out, 3x3, stride, pad=0) -> ReLU.

    Returns the output in channel-major (C_out, B*Ho*Wo) bf16 layout, which is what the
    next fused NAS layer should consume (lane-dense pixel axis, no NCHW round trip)."""
    B, C_in, H, W = obs.shape
    C_out, _, kh, kw = weight.shape
    K = C_in * kh * kw

    # Fold pixel normalization into the tiny weight/bias (free, wrapper-side):
    #   conv(x/255 - 0.5) + b == conv(x) @ (W/255) + (b - 0.5 * sum_K W)
    w_f32 = weight.reshape(C_out, K).astype(jnp.float32)
    w_fold = (w_f32 * (1.0 / 255.0)).astype(jnp.bfloat16)                  # (C_out, K) bf16
    b_fold = (bias.astype(jnp.float32) - 0.5 * w_f32.sum(axis=1)).reshape(C_out, 1)  # f32

    # Layout plumbing (im2col) in the wrapper, in a narrow dtype: bf16 is exact for
    # integer pixel values 0..255, so the dominant (K, M) HBM stream is halved vs f32.
    obs_n = obs.astype(jnp.bfloat16)
    p, Ho, Wo = _im2col_T(obs_n, kh, stride)          # (K, M) raw pixel values, bf16
    M = B * Ho * Wo
    M_pad = _round_up(M, 128)
    # Lane-dense tile (multiple of 128); cap so that there are >= 2 grid steps whenever
    # possible, so the "parallel" axis gives work to both v7x TensorCores.
    TM = min(tm, max(128, _round_up(pl.cdiv(M, 2), 128)))
    p = jnp.pad(p, ((0, 0), (0, M_pad - M)))
    grid_m = pl.cdiv(M_pad, TM)

    out_cm = pl.pallas_call(
        _fused_first_conv_kernel,
        out_shape=jax.ShapeDtypeStruct((C_out, M_pad), jnp.bfloat16),
        grid_spec=pltpu.PrefetchScalarGridSpec(
            num_scalar_prefetch=0,
            grid=(grid_m,),
            in_specs=[
                pl.BlockSpec((C_out, K), lambda i: (0, 0)),   # folded weights: resident
                pl.BlockSpec((C_out, 1), lambda i: (0, 0)),   # folded bias: resident
                pl.BlockSpec((K, TM), lambda i: (0, i)),      # bf16 patch tile
            ],
            out_specs=pl.BlockSpec((C_out, TM), lambda i: (0, i)),
        ),
        compiler_params=pltpu.CompilerParams(
            dimension_semantics=("parallel",),                # shard M tiles across TCs
        ),
        cost_estimate=pl.CostEstimate(
            flops=2 * C_out * K * M_pad + C_out * M_pad,
            transcendentals=0,
            bytes_accessed=(2 * C_out * K + 4 * C_out          # bf16 W, f32 b
                            + 2 * K * M_pad                    # bf16 patches
                            + 2 * C_out * M_pad),              # bf16 output
        ),
    )(w_fold, b_fold, p)

    return out_cm[:, :M]                                       # (C_out, M) bf16


def channels_major_to_nchw(out_cm, B, Ho, Wo):
    """Convert (C_out, B*Ho*Wo) -> (B, C_out, Ho, Wo). Only for tests / final consumers;
    the next fused NAS layer should keep the (C_out, M) layout."""
    C_out = out_cm.shape[0]
    return out_cm.reshape(C_out, B, Ho, Wo).transpose(1, 0, 2, 3)


if __name__ == "__main__":
    key = jax.random.PRNGKey(0)
    k1, k2, k3 = jax.random.split(key, 3)

    # Small shapes consistent with the module: NCHW image batch of raw pixel values,
    # 32 output channels, 3x3 stride-2 first conv.
    B, C_in, H, W = 2, 4, 16, 16
    C_out, ksz, stride = 32, 3, 2
    # Integer-valued pixels (as in real RL observations) -> exactly representable in bf16.
    obs = jnp.round(jax.random.uniform(k1, (B, C_in, H, W), jnp.float32, 0.0, 255.0))
    weight = jax.random.normal(k2, (C_out, C_in, ksz, ksz), jnp.float32) * 0.1
    bias = jax.random.normal(k3, (C_out,), jnp.float32) * 0.1

    out_cm = encoder_first_layer_cm(obs, weight, bias, stride=stride)
    out_cm = jax.block_until_ready(out_cm)

    Ho = (H - ksz) // stride + 1
    Wo = (W - ksz) // stride + 1
    out = channels_major_to_nchw(out_cm, B, Ho, Wo).astype(jnp.float32)

    # Reference: normalize, conv (stride 2, VALID), bias, ReLU — same as the PyTorch
    # forward's first layer with Identity norm and the default ReLU activation.
    obs_n = obs / 255.0 - 0.5
    ref = jax.lax.conv_general_dilated(
        obs_n, weight, window_strides=(stride, stride), padding="VALID",
        dimension_numbers=("NCHW", "OIHW", "NCHW"),
        precision=jax.lax.Precision.HIGHEST)
    ref = jnp.maximum(ref + bias[None, :, None, None], 0.0)

    assert out.shape == ref.shape, (out.shape, ref.shape)
    assert out_cm.dtype == jnp.bfloat16
    # bf16 weights / bf16 MXU / bf16 output -> tolerance loosened accordingly (review note).
    assert jnp.allclose(out, ref, atol=2e-2, rtol=2e-2), "mismatch vs reference conv"

    print("KERNEL_OK")
</pallas_src>

<mosaic_0001>
module attributes {stable_mosaic.version = 11 : i64} {
  func.func @_fused_first_conv_kernel(%arg0: i32, %arg1: memref<32x36xbf16, #tpu.memory_space<vmem>>, %arg2: memref<32x1xf32, #tpu.memory_space<vmem>>, %arg3: memref<36x128xbf16, #tpu.memory_space<vmem>>, %arg4: memref<32x128xbf16, #tpu.memory_space<vmem>>) attributes {dimension_semantics = [#tpu.dimension_semantics<parallel>], iteration_bounds = array<i64: 1>, scalar_prefetch = 0 : i64, scratch_operands = 0 : i64, tpu.core_type = #tpu.core_type<tc>, window_params = [{pipeline_mode = #tpu.pipeline_mode<synchronous>, transform_indices = @transform_0, window_bounds = array<i64: 32, 36>}, {pipeline_mode = #tpu.pipeline_mode<synchronous>, transform_indices = @transform_1, window_bounds = array<i64: 32, 1>}, {transform_indices = @transform_2, window_bounds = array<i64: 36, 128>}, {transform_indices = @transform_3, window_bounds = array<i64: 32, 128>}]} {
    %c0 = arith.constant 0 : index
    %c0_0 = arith.constant 0 : index
    %0 = vector.load %arg1[%c0, %c0_0] : memref<32x36xbf16, #tpu.memory_space<vmem>>, vector<32x36xbf16>
    %c0_1 = arith.constant 0 : index
    %c0_2 = arith.constant 0 : index
    %1 = vector.load %arg3[%c0_1, %c0_2] : memref<36x128xbf16, #tpu.memory_space<vmem>>, vector<36x128xbf16>
    %cst = arith.constant dense<0.000000e+00> : vector<32x128xf32>
    %2 = tpu.matmul %0, %1, %cst {dimension_numbers = #tpu.dot_dimension_numbers<[1], [0], [0], [1], [0, 0, 1, 1], [], []>} : vector<32x36xbf16>, vector<36x128xbf16>, vector<32x128xf32> -> vector<32x128xf32>
    %c0_3 = arith.constant 0 : index
    %c0_4 = arith.constant 0 : index
    %3 = vector.load %arg2[%c0_3, %c0_4] : memref<32x1xf32, #tpu.memory_space<vmem>>, vector<32x1xf32>
    %4 = vector.broadcast %3 : vector<32x1xf32> to vector<32x128xf32>
    %5 = arith.addf %2, %4 : vector<32x128xf32>
    %cst_5 = arith.constant 0.000000e+00 : f32
    %6 = vector.broadcast %cst_5 : f32 to vector<32x128xf32>
    %7 = arith.maximumf %5, %6 : vector<32x128xf32>
    %8 = arith.truncf %7 : vector<32x128xf32> to vector<32x128xbf16>
    %c0_6 = arith.constant 0 : index
    %c0_7 = arith.constant 0 : index
    %9 = vector.load %arg4[%c0_6, %c0_7] : memref<32x128xbf16, #tpu.memory_space<vmem>>, vector<32x128xbf16>
    tpu.vector_store %arg4[%c0_6, %c0_7], %8 {strides = array<i32>} : memref<32x128xbf16, #tpu.memory_space<vmem>>, vector<32x128xbf16>,
    return
  }
  func.func @transform_0(%arg0: i32) -> (i32, i32) {
    %c0_i32 = arith.constant 0 : i32
    %c0_i32_0 = arith.constant 0 : i32
    %c0_i32_1 = arith.constant 0 : i32
    return %c0_i32, %c0_i32_0 : i32, i32
  }
  func.func @transform_1(%arg0: i32) -> (i32, i32) {
    %c0_i32 = arith.constant 0 : i32
    %c0_i32_0 = arith.constant 0 : i32
    %c0_i32_1 = arith.constant 0 : i32
    return %c0_i32, %c0_i32_0 : i32, i32
  }
  func.func @transform_2(%arg0: i32) -> (i32, i32) {
    %c0_i32 = arith.constant 0 : i32
    %c0_i32_0 = arith.constant 0 : i32
    return %c0_i32, %arg0 : i32, i32
  }
  func.func @transform_3(%arg0: i32) -> (i32, i32) {
    %c0_i32 = arith.constant 0 : i32
    %c0_i32_0 = arith.constant 0 : i32
    return %c0_i32, %arg0 : i32, i32
  }
}

</mosaic_0001>

<llo_original>
// kernel: encoder_first_layer_cm.1
$region0: #{encoder_first_layer_cm.1}
  #allocation0 [shape = 'u32[]', space=smem, size = 0x4, offset = 0x4, fixed_abs, tag = 'smem constant byte address 0x4 - core index']
  #allocation1 [shape = 'u32[144,128]{1,0:T(1,128)}', space=vmem, size = 0x12000, scoped, tag = 'internal scratch']
  %s0 = inlined_call_operand.vmem [shape: bf16[32,36], index: 0, kind: input, shape index: {}]
  %s1 = inlined_call_operand.vmem [shape: f32[32,1], index: 1, kind: input, shape index: {}]
  %s2 = inlined_call_operand.vmem [shape: bf16[36,128], index: 2, kind: input, shape index: {}]
  %s3 = inlined_call_operand.hbm [shape: bf16[32,128], index: 3, kind: output, shape index: {}]
  %s4 = sld [smem:[#allocation0]]
  $region22: #{encoder_first_layer_cm.1} parent=0
    _
  %s6 = ssub.s32 1, %s4
  %s7 = scalar_select 0, %s6, %s4
  $region1: #{encoder_first_layer_cm.1} parent=0
    #allocation2 [shape = 'u8[8192]{0}', space=vmem, size = 0x2000, scoped, tag = 'output window, operand 0, single buffered']
    #allocation3 [shape = 's32[1]{0}', space=sflag, size = 0x4, scoped, tag = 'scoped memory for encoder_first_layer_cm.1']
    %8 = vsyncpa [#allocation3], 0
    // Predicated region
    $region2: #{encoder_first_layer_cm.1} parent=1 // pred_check
      _
    $region3: #{encoder_first_layer_cm.1} parent=1 // pred_check_branch
      %10 = sbr.rel (0) target = $region5
    $region4: #{encoder_first_layer_cm.1} parent=1 // pred_region
      _
    $region5: #{encoder_first_layer_cm.1} parent=1 // pred_fallthru
      _
    // Predicated region
    $region6: #{encoder_first_layer_cm.1} parent=1 // pred_check
      _
    $region7: #{encoder_first_layer_cm.1} parent=1 // pred_check_branch
      %12 = sbr.rel (0) target = $region9
    $region8: #{encoder_first_layer_cm.1} parent=1 // pred_region
      _
    $region9: #{encoder_first_layer_cm.1} parent=1 // pred_fallthru
      _
    // Predicated region
    $region10: #{encoder_first_layer_cm.1} parent=1 // pred_check
      _
    $region11: #{encoder_first_layer_cm.1} parent=1 // pred_check_branch
      %14 = sbr.rel (0) target = $region13
    $region12: #{encoder_first_layer_cm.1} parent=1 // pred_region
      _
    $region13: #{encoder_first_layer_cm.1} parent=1 // pred_fallthru
      _
    %v16 = vld [vmem:[%s0] sm:$0xf]
    %v17 = vld [vmem:[%s0 + $0x4] sm:$0xf]
    %v18 = vld [vmem:[%s0 + $0x8] sm:$0xf]
    %v19 = vld [vmem:[%s0 + $0xc] sm:$0xf]
    %v20 = vld [vmem:[%s2] sm:$0xf]
    %v21 = vld [vmem:[%s2 + $0x4] sm:$0xf]
    %v22 = vld [vmem:[%s2 + $0x8] sm:$0xf]
    %v23 = vld [vmem:[%s2 + $0xc] sm:$0xf]
    %v24 = vld [vmem:[%s2 + $0x10] sm:$0x3]
    %v25 = vld [vmem:[%s1] sm:$0xff]
    %v26 = vld [vmem:[%s1 + $0x8] sm:$0xff]
    %v27 = vld [vmem:[%s1 + $0x10] sm:$0xff]
    %v28 = vld [vmem:[%s1 + $0x18] sm:$0xff]
    %30 = vset.pattern.permute.xlu0 0
    %31 = vperm.xlu0 %30, %v25
    %v32 = vpop.permute.xlu0 %31
    %35 = vset.pattern.permute.xlu0 0
    %36 = vperm.xlu0 %35, %v26
    %v37 = vpop.permute.xlu0 %36
    %40 = vset.pattern.permute.xlu0 0
    %41 = vperm.xlu0 %40, %v27
    %v42 = vpop.permute.xlu0 %41
    %45 = vset.pattern.permute.xlu0 0
    %46 = vperm.xlu0 %45, %v28
    %v47 = vpop.permute.xlu0 %46
    %v53 = vunpack.c.l.b16 %v16
    %v54 = vunpack.c.l.b16 %v17
    %v55 = vunpack.c.l.b16 %v18
    %v56 = vunpack.c.l.b16 %v19
    %v57 = vpack.c.b16 %v54, %v53
    %v58 = vpack.c.b16 %v56, %v55
    %v64 = vunpack.c.l.b16 %v20
    %v65 = vunpack.c.l.b16 %v21
    %v66 = vunpack.c.l.b16 %v22
    %v67 = vunpack.c.l.b16 %v23
    %v68 = vunpack.c.l.b16 %v24
    %v69 = vpack.c.b16 %v65, %v64
    %v70 = vpack.c.b16 %v67, %v66
    %v71 = vpack.c.b16 %v68, %v68
    %vm74 = vcmask 293888
    %v76 = vsel %vm74, %v57, 0
    %v79 = vsel %vm74, %v58, 0
    %vm81 = vcmask 1041408
    %v83 = vsel %vm81, %v71, 0
    %85 = vmatprep.subr.bf16.mxu0 0
    %86 = vmatpush1.bf16.msra.mxu0 0
    %87 = vmatprep.subr.bf16.mxu0 0
    %88 = vmatpush1.bf16.msra.mxu0 0
    %89 = vmatprep.subr.bf16.mxu0 0
    %90 = vmatpush1.bf16.msra.mxu0 0
    %91 = vmatprep.subr.bf16.mxu0 0
    %92 = vmatpush1.bf16.msra.mxu0 0
    %93 = vmatprep.subr.bf16.mxu0 0
    %94 = vmatpush1.bf16.msra.mxu0 0
    %95 = vmatprep.subr.bf16.mxu0 0
    %96 = vmatpush1.bf16.msra.mxu0 %v83
    %97 = vmatprep.subr.bf16.mxu0 0
    %98 = vmatpush1.bf16.msra.mxu0 %v70
    %99 = vmatprep.subr.bf16.mxu0 0
    %100 = vmatpush1.bf16.msra.mxu0 %v69
    %101 = vmatprep.subr.bf16.mxu0 0
    %102 = vmatpush2.bf16.msra.mxu0 0
    %103 = vmatprep.subr.bf16.mxu0 0
    %104 = vmatpush2.bf16.msra.mxu0 0
    %105 = vmatprep.subr.bf16.mxu0 0
    %106 = vmatpush2.bf16.msra.mxu0 0
    %107 = vmatprep.subr.bf16.mxu0 0
    %108 = vmatpush2.bf16.msra.mxu0 0
    %109 = vmatprep.subr.bf16.mxu0 0
    %110 = vmatpush2.bf16.msra.mxu0 0
    %111 = vmatprep.subr.bf16.mxu0 0
    %112 = vmatpush2.bf16.msra.mxu0 0
    %113 = vmatprep.subr.bf16.mxu0 0
    %114 = vmatpush2.bf16.msra.mxu0 0
    %115 = vmatprep.subr.bf16.mxu0 0
    %116 = vmatpush2.bf16.msra.mxu0 0
    %117 = vmatprep.mubr.bf16.mxu0 0
    %118 = vmatmul.mubr.bf16.gmra.mxu0 %v76
    %v119 = vpop.f32.mrf.mxu0
    %v120 = vadd.f32 %v32, %v119
    %v121 = vpop.f32.mrf.mxu0
    %v122 = vpop.f32.mrf.mxu0
    %v123 = vadd.f32 %v37, %v122
    %v124 = vpop.f32.mrf.mxu0
    %125 = vmatprep.mubr.bf16.mxu0 0
    %126 = vmatmul.mubr.bf16.gmra.mxu0 %v79
    %v127 = vpop.f32.mrf.mxu0
    %v128 = vadd.f32 %v42, %v127
    %v129 = vpop.f32.mrf.mxu0
    %v130 = vpop.f32.mrf.mxu0
    %v131 = vadd.f32 %v47, %v130
    %v132 = vpop.f32.mrf.mxu0
    %133 = vdwg.mxu0
    %v134 = vmax.f32 %v120, 0.0
    %v135 = vmax.f32 %v123, 0.0
    %v136 = vmax.f32 %v128, 0.0
    %v137 = vmax.f32 %v131, 0.0
    %v138 = vpack.c.bf16 %v135, %v134
    %v139 = vpack.c.bf16 %v137, %v136
    %v142 = vunpack.c.l.b16 %v138
    %v143 = vunpack.c.h.b16 %v138
    %v144 = vunpack.c.l.b16 %v139
    %v145 = vunpack.c.h.b16 %v139
    %v146 = vpack.c.b16 %v142, %v142
    %v147 = vpack.c.b16 %v143, %v143
    %v148 = vpack.c.b16 %v144, %v144
    %v149 = vpack.c.b16 %v145, %v145
    %154 = vst [vmem:[#allocation2] sm:$0xf] %v146
    %155 = vst [vmem:[#allocation2 + $0x4] sm:$0xf] %v147
    %156 = vst [vmem:[#allocation2 + $0x8] sm:$0xf] %v148
    %157 = vst [vmem:[#allocation2 + $0xc] sm:$0xf] %v149
    // Predicated region
    $region14: #{encoder_first_layer_cm.1} parent=1 // pred_check
      _
    $region15: #{encoder_first_layer_cm.1} parent=1 // pred_check_branch
      %159 = sbr.rel (0) target = $region17
    $region16: #{encoder_first_layer_cm.1} parent=1 // pred_region
      %s161 = ssub.s32 256, 256
      %162 = vsyncadd [#allocation3], %s161
      %s163 = sshll.u32 [#allocation2], 4
      %s164 = int_to_ptr.vmem [resolvable:$true] %s163
      %169 = dma.vmem_to_hbm [thread:$0]  %s164, 256, %s3, [#allocation3], 64, 64, 4
    $region17: #{encoder_first_layer_cm.1} parent=1 // pred_fallthru
      _
    // Predicated region
    $region18: #{encoder_first_layer_cm.1} parent=1 // pred_check
      _
    $region19: #{encoder_first_layer_cm.1} parent=1 // pred_check_branch
      %171 = sbr.rel (0) target = $region21
    $region20: #{encoder_first_layer_cm.1} parent=1 // pred_region
      %172 = dma.done [#allocation3], 256
    $region21: #{encoder_first_layer_cm.1} parent=1 // pred_fallthru
      _
    %173 = vsyncpa [#allocation3], 1

</llo_original>
